<compile_context>
chip_gen: v5e
topology: v5e:2x2
jax: 0.10.0
libtpu: 0.0.40
codegen_flags: <defaults>
</compile_context>

<pallas_src>
import math

import jax
import jax.numpy as jnp
from jax.experimental import pallas as pl
from jax.experimental.pallas import tpu as pltpu


def _round_up(x, m):
    return ((x + m - 1) // m) * m


def _cdiv(a, b):
    return -(-a // b)


def _make_pow_fn(gamma):
    # (1 - p) ** gamma, specialized at trace time; safe at the 0 boundary.
    if gamma == 0.0:
        return lambda x: jnp.ones_like(x)
    if gamma == 0.5:
        return lambda x: jnp.sqrt(jnp.maximum(x, 0.0))
    if gamma == 1.0:
        return lambda x: x
    return lambda x: jnp.exp(gamma * jnp.log(jnp.maximum(x, 1e-30)))


def _make_nfl_rce_kernel(n_total, alpha, beta, gamma, tile_n,
                         tiles_per_half, n_tiles):
    neg_log_1e4 = -math.log(1e-4)      # -log of the one-hot clamp floor (RCE)
    inv_n = 1.0 / float(n_total)       # folds both batch means
    last_blk = n_tiles - 1
    pow_fn = _make_pow_fn(gamma)

    def kernel(pred_ref, labels_ref, out_ref, acc_ref):
        h = pl.program_id(0)           # batch half (parallel: v7x 2-TC split)
        i = pl.program_id(1)           # tile within half (reduction axis)
        blk = h * tiles_per_half + i   # global (unclamped) block index

        @pl.when(i == 0)
        def _():
            acc_ref[...] = jnp.zeros_like(acc_ref)

        x = pred_ref[...].astype(jnp.float32)        # (C, TN) logits
        labels = labels_ref[...]                     # (1, TN) int32

        # --- softmax / log-softmax over classes (sublane axis 0) ---
        m = jnp.max(x, axis=0, keepdims=True)        # (1, TN)
        xm = x - m
        e = jnp.exp(xm)                              # (C, TN)
        se = jnp.sum(e, axis=0, keepdims=True)       # (1, TN)
        logpt = xm - jnp.log(se)                     # (C, TN) log_softmax
        p = e * pl.reciprocal(se, approx=False)      # (C, TN) softmax

        # gather the label entry with one masked reduce (no one-hot array)
        cls = jax.lax.broadcasted_iota(jnp.int32, x.shape, 0)
        logpt_y = jnp.sum(jnp.where(cls == labels, logpt, 0.0),
                          axis=0, keepdims=True)     # (1, TN)
        pt_y = jnp.exp(logpt_y)                      # (1, TN)

        # --- Normalized Focal Loss (per row) ---
        normalizor = jnp.sum(-pow_fn(1.0 - p) * logpt, axis=0, keepdims=True)
        nfl = -pow_fn(1.0 - pt_y) * logpt_y / normalizor          # (1, TN)

        # --- Reverse Cross Entropy (per row) ---
        sum_pc = jnp.sum(jnp.maximum(p, 1e-7), axis=0, keepdims=True)
        p_c_y = jnp.clip(pt_y, 1e-7, 1.0)
        rce = neg_log_1e4 * (sum_pc - p_c_y)                      # (1, TN)

        loss_row = alpha * nfl + beta * rce                       # (1, TN)

        # full in-range tiles: plain accumulate (no iota/cmp/select)
        @pl.when(blk < last_blk)
        def _():
            acc_ref[...] += loss_row

        # last (ragged) or out-of-range tile: select-mask padded columns.
        # Select (not multiply-by-0) so garbage-column NaN/inf never reaches acc.
        @pl.when(blk >= last_blk)
        def _():
            lane = jax.lax.broadcasted_iota(jnp.int32, (1, tile_n), 1)
            valid = (blk * tile_n + lane) < n_total
            acc_ref[...] += jnp.where(valid, loss_row, 0.0)

        # per-half epilogue: write this half's partial (already 1/N scaled)
        # into lane 0 of its own (1,128) output block, zeros elsewhere.
        @pl.when(i == pl.num_programs(1) - 1)
        def _():
            lane0 = jax.lax.broadcasted_iota(jnp.int32, (1, 128), 1) == 0
            out_ref[...] = jnp.where(lane0, jnp.sum(acc_ref[...]) * inv_n, 0.0)

    return kernel


def nfl_and_rce_loss(pred, labels, num_classes, alpha=1.0, beta=1.0,
                     gamma=0.5, tile_n=8192):
    """Fused NFLandRCE forward. pred: (N, C) float, labels: (N,) int -> f32 scalar."""
    n, c = pred.shape
    assert c == num_classes

    tile_eff = min(_round_up(tile_n, 128), _round_up(n, 128))
    n_tiles = _cdiv(n, tile_eff)
    tiles_per_half = _cdiv(n_tiles, 2)
    last_blk = n_tiles - 1

    # (C, N): batch on the 128-wide lane axis, classes on sublanes.
    # No padding -> this is a single HBM copy (see header comment / TODO).
    pred_t = jnp.transpose(pred)
    labels_2d = labels.astype(jnp.int32).reshape(1, n)

    kernel = _make_nfl_rce_kernel(n, float(alpha), float(beta), float(gamma),
                                  tile_eff, tiles_per_half, n_tiles)

    def blk_map(h, i):
        # clamp: when n_tiles is odd, half 1 has one fully-out-of-range block;
        # it re-reads the last real block and is zeroed by the in-kernel mask.
        return (0, jnp.minimum(h * tiles_per_half + i, last_blk))

    out = pl.pallas_call(
        kernel,
        out_shape=jax.ShapeDtypeStruct((1, 256), jnp.float32),
        grid_spec=pltpu.PrefetchScalarGridSpec(
            num_scalar_prefetch=0,
            grid=(2, tiles_per_half),
            in_specs=[
                pl.BlockSpec((c, tile_eff), blk_map),
                pl.BlockSpec((1, tile_eff), blk_map),
            ],
            out_specs=pl.BlockSpec((1, 128), lambda h, i: (0, h)),
            scratch_shapes=[pltpu.VMEM((1, tile_eff), jnp.float32)],
        ),
        compiler_params=pltpu.CompilerParams(
            dimension_semantics=("parallel", "arbitrary"),
            vmem_limit_bytes=32 << 20,
        ),
    )(pred_t, labels_2d)
    # non-lane-0 entries are written as exact zeros, so a plain sum combines
    # the two per-core partials.
    return jnp.sum(out)


def _reference(pred, labels, num_classes, alpha=1.0, beta=1.0, gamma=0.5):
    x = pred.astype(jnp.float32)
    # NormalizedFocalLoss
    logpt = jax.nn.log_softmax(x, axis=1)
    pt_all = jnp.exp(logpt)
    normalizor = jnp.sum(-1.0 * (1.0 - pt_all) ** gamma * logpt, axis=1)
    logpt_y = jnp.take_along_axis(logpt, labels[:, None].astype(jnp.int32),
                                  axis=1)[:, 0]
    pt_y = jnp.exp(logpt_y)
    nfl = -1.0 * (1.0 - pt_y) ** gamma * logpt_y
    nfl = jnp.mean(alpha * nfl / normalizor)
    # ReverseCrossEntropy
    p = jnp.clip(jax.nn.softmax(x, axis=1), 1e-7, 1.0)
    oh = jnp.clip(jax.nn.one_hot(labels, num_classes, dtype=jnp.float32),
                  1e-4, 1.0)
    rce = -jnp.sum(p * jnp.log(oh), axis=1)
    return nfl + beta * jnp.mean(rce)


if __name__ == "__main__":
    key = jax.random.PRNGKey(0)
    k1, k2, k3, k4 = jax.random.split(key, 4)

    # small shapes consistent with the module: num_classes=10 (module default),
    # batch=100 (non-multiple of 128 to exercise the masked ragged tail)
    N, C = 100, 10
    alpha, beta, gamma = 1.0, 1.0, 0.5

    pred = jax.random.normal(k1, (N, C), dtype=jnp.float32)
    labels = jax.random.randint(k2, (N,), 0, C, dtype=jnp.int32)

    out = jax.block_until_ready(
        nfl_and_rce_loss(pred, labels, num_classes=C,
                         alpha=alpha, beta=beta, gamma=gamma))
    ref = jax.block_until_ready(_reference(pred, labels, C, alpha, beta, gamma))
    assert jnp.allclose(out, ref, rtol=1e-4, atol=1e-6), (out, ref)

    # multi-tile path: small tile forces several grid steps in both halves,
    # a ragged tail block, and one fully-out-of-range (clamped) block.
    N2 = 4133
    pred2 = jax.random.normal(k3, (N2, C), dtype=jnp.float32)
    labels2 = jax.random.randint(k4, (N2,), 0, C, dtype=jnp.int32)
    ref2 = jax.block_until_ready(_reference(pred2, labels2, C, alpha, beta, gamma))

    out2 = jax.block_until_ready(
        nfl_and_rce_loss(pred2, labels2, num_classes=C,
                         alpha=alpha, beta=beta, gamma=gamma, tile_n=512))
    assert jnp.allclose(out2, ref2, rtol=1e-4, atol=1e-6), (out2, ref2)

    # default large-tile path on the same data
    out3 = jax.block_until_ready(
        nfl_and_rce_loss(pred2, labels2, num_classes=C,
                         alpha=alpha, beta=beta, gamma=gamma))
    assert jnp.allclose(out3, ref2, rtol=1e-4, atol=1e-6), (out3, ref2)

    print("KERNEL_OK")
</pallas_src>

<mosaic_0001>
module attributes {stable_mosaic.version = 11 : i64} {
  func.func @kernel(%arg0: i32, %arg1: i32, %arg2: memref<10x128xf32, #tpu.memory_space<vmem>>, %arg3: memref<1x128xi32, #tpu.memory_space<vmem>>, %arg4: memref<1x128xf32, #tpu.memory_space<vmem>>, %arg5: memref<1x128xf32, #tpu.memory_space<vmem>>) attributes {dimension_semantics = [#tpu.dimension_semantics<parallel>, #tpu.dimension_semantics<arbitrary>], iteration_bounds = array<i64: 2, 1>, scalar_prefetch = 0 : i64, scratch_operands = 1 : i64, tpu.core_type = #tpu.core_type<tc>, window_params = [{transform_indices = @transform_0, window_bounds = array<i64: 10, 128>}, {transform_indices = @transform_1, window_bounds = array<i64: 1, 128>}, {transform_indices = @transform_2, window_bounds = array<i64: 1, 128>}]} {
    %c1_i32 = arith.constant 1 : i32
    %0 = arith.muli %arg0, %c1_i32 : i32
    %1 = arith.addi %0, %arg1 : i32
    %c0_i32 = arith.constant 0 : i32
    %2 = arith.cmpi eq, %arg1, %c0_i32 : i32
    %3 = arith.extui %2 : i1 to i32
    %c0_i32_0 = arith.constant 0 : i32
    %4 = arith.cmpi ne, %3, %c0_i32_0 : i32
    scf.if %4 {
      %cst_27 = arith.constant 0.000000e+00 : f32
      %72 = vector.broadcast %cst_27 : f32 to vector<1x128xf32>
      %c0_28 = arith.constant 0 : index
      %c0_29 = arith.constant 0 : index
      %73 = vector.load %arg5[%c0_28, %c0_29] : memref<1x128xf32, #tpu.memory_space<vmem>>, vector<1x128xf32>
      tpu.vector_store %arg5[%c0_28, %c0_29], %72 {strides = array<i32>} : memref<1x128xf32, #tpu.memory_space<vmem>>, vector<1x128xf32>,
    } else {
    }
    %c0 = arith.constant 0 : index
    %c0_1 = arith.constant 0 : index
    %5 = vector.load %arg2[%c0, %c0_1] : memref<10x128xf32, #tpu.memory_space<vmem>>, vector<10x128xf32>
    %c0_2 = arith.constant 0 : index
    %c0_3 = arith.constant 0 : index
    %6 = vector.load %arg3[%c0_2, %c0_3] : memref<1x128xi32, #tpu.memory_space<vmem>>, vector<1x128xi32>
    %cst = arith.constant dense<0xFF800000> : vector<128xf32>
    %7 = vector.multi_reduction <maximumf>, %5, %cst [0] : vector<10x128xf32> to vector<128xf32>
    %8 = vector.shape_cast %7 : vector<128xf32> to vector<1x128xf32>
    %9 = vector.broadcast %8 : vector<1x128xf32> to vector<10x128xf32>
    %10 = arith.subf %5, %9 : vector<10x128xf32>
    %11 = math.exp %10 : vector<10x128xf32>
    %cst_4 = arith.constant dense<0.000000e+00> : vector<128xf32>
    %12 = vector.multi_reduction <add>, %11, %cst_4 [0] : vector<10x128xf32> to vector<128xf32>
    %13 = vector.shape_cast %12 : vector<128xf32> to vector<1x128xf32>
    %14 = math.log %13 : vector<1x128xf32>
    %15 = vector.broadcast %14 : vector<1x128xf32> to vector<10x128xf32>
    %16 = arith.subf %10, %15 : vector<10x128xf32>
    %17 = tpu.reciprocal %13 : vector<1x128xf32> -> vector<1x128xf32>
    %18 = vector.broadcast %17 : vector<1x128xf32> to vector<10x128xf32>
    %19 = arith.mulf %11, %18 : vector<10x128xf32>
    %20 = tpu.iota {dimensions = array<i32: 0>} : vector<10x128xi32>
    %21 = vector.broadcast %6 : vector<1x128xi32> to vector<10x128xi32>
    %22 = arith.cmpi eq, %20, %21 : vector<10x128xi32>
    %cst_5 = arith.constant 0.000000e+00 : f32
    %23 = vector.broadcast %cst_5 : f32 to vector<10x128xf32>
    %24 = arith.select %22, %16, %23 : vector<10x128xi1>, vector<10x128xf32>
    %cst_6 = arith.constant dense<0.000000e+00> : vector<128xf32>
    %25 = vector.multi_reduction <add>, %24, %cst_6 [0] : vector<10x128xf32> to vector<128xf32>
    %26 = vector.shape_cast %25 : vector<128xf32> to vector<1x128xf32>
    %27 = math.exp %26 : vector<1x128xf32>
    %cst_7 = arith.constant 1.000000e+00 : f32
    %28 = vector.broadcast %cst_7 : f32 to vector<10x128xf32>
    %29 = arith.subf %28, %19 : vector<10x128xf32>
    %cst_8 = arith.constant 0.000000e+00 : f32
    %30 = vector.broadcast %cst_8 : f32 to vector<10x128xf32>
    %31 = arith.maximumf %29, %30 : vector<10x128xf32>
    %32 = math.sqrt %31 : vector<10x128xf32>
    %cst_9 = arith.constant 0.000000e+00 : f32
    %33 = vector.broadcast %cst_9 : f32 to vector<10x128xf32>
    %34 = arith.subf %33, %32 : vector<10x128xf32>
    %35 = arith.mulf %34, %16 : vector<10x128xf32>
    %cst_10 = arith.constant dense<0.000000e+00> : vector<128xf32>
    %36 = vector.multi_reduction <add>, %35, %cst_10 [0] : vector<10x128xf32> to vector<128xf32>
    %37 = vector.shape_cast %36 : vector<128xf32> to vector<1x128xf32>
    %cst_11 = arith.constant 1.000000e+00 : f32
    %38 = vector.broadcast %cst_11 : f32 to vector<1x128xf32>
    %39 = arith.subf %38, %27 : vector<1x128xf32>
    %cst_12 = arith.constant 0.000000e+00 : f32
    %40 = vector.broadcast %cst_12 : f32 to vector<1x128xf32>
    %41 = arith.maximumf %39, %40 : vector<1x128xf32>
    %42 = math.sqrt %41 : vector<1x128xf32>
    %cst_13 = arith.constant 0.000000e+00 : f32
    %43 = vector.broadcast %cst_13 : f32 to vector<1x128xf32>
    %44 = arith.subf %43, %42 : vector<1x128xf32>
    %45 = arith.mulf %44, %26 : vector<1x128xf32>
    %46 = arith.divf %45, %37 : vector<1x128xf32>
    %cst_14 = arith.constant 1.000000e-07 : f32
    %47 = vector.broadcast %cst_14 : f32 to vector<10x128xf32>
    %48 = arith.maximumf %19, %47 : vector<10x128xf32>
    %cst_15 = arith.constant dense<0.000000e+00> : vector<128xf32>
    %49 = vector.multi_reduction <add>, %48, %cst_15 [0] : vector<10x128xf32> to vector<128xf32>
    %50 = vector.shape_cast %49 : vector<128xf32> to vector<1x128xf32>
    %cst_16 = arith.constant 1.000000e-07 : f32
    %cst_17 = arith.constant 1.000000e+00 : f32
    %51 = vector.broadcast %cst_16 : f32 to vector<1x128xf32>
    %52 = arith.maximumf %51, %27 : vector<1x128xf32>
    %53 = vector.broadcast %cst_17 : f32 to vector<1x128xf32>
    %54 = arith.minimumf %53, %52 : vector<1x128xf32>
    %55 = arith.subf %50, %54 : vector<1x128xf32>
    %cst_18 = arith.constant 9.21034049 : f32
    %56 = vector.broadcast %cst_18 : f32 to vector<1x128xf32>
    %57 = arith.mulf %56, %55 : vector<1x128xf32>
    %cst_19 = arith.constant 1.000000e+00 : f32
    %58 = vector.broadcast %cst_19 : f32 to vector<1x128xf32>
    %59 = arith.mulf %58, %46 : vector<1x128xf32>
    %cst_20 = arith.constant 1.000000e+00 : f32
    %60 = vector.broadcast %cst_20 : f32 to vector<1x128xf32>
    %61 = arith.mulf %60, %57 : vector<1x128xf32>
    %62 = arith.addf %59, %61 : vector<1x128xf32>
    %c0_i32_21 = arith.constant 0 : i32
    %63 = arith.cmpi slt, %1, %c0_i32_21 : i32
    %64 = arith.extui %63 : i1 to i32
    %c0_i32_22 = arith.constant 0 : i32
    %65 = arith.cmpi ne, %64, %c0_i32_22 : i32
    scf.if %65 {
      %c0_27 = arith.constant 0 : index
      %c0_28 = arith.constant 0 : index
      %72 = vector.load %arg5[%c0_27, %c0_28] : memref<1x128xf32, #tpu.memory_space<vmem>>, vector<1x128xf32>
      %73 = arith.addf %72, %62 : vector<1x128xf32>
      %c0_29 = arith.constant 0 : index
      %c0_30 = arith.constant 0 : index
      %74 = vector.load %arg5[%c0_29, %c0_30] : memref<1x128xf32, #tpu.memory_space<vmem>>, vector<1x128xf32>
      tpu.vector_store %arg5[%c0_29, %c0_30], %73 {strides = array<i32>} : memref<1x128xf32, #tpu.memory_space<vmem>>, vector<1x128xf32>,
    } else {
    }
    %c0_i32_23 = arith.constant 0 : i32
    %66 = arith.cmpi sge, %1, %c0_i32_23 : i32
    %67 = arith.extui %66 : i1 to i32
    %c0_i32_24 = arith.constant 0 : i32
    %68 = arith.cmpi ne, %67, %c0_i32_24 : i32
    scf.if %68 {
      %72 = tpu.iota {dimensions = array<i32: 1>} : vector<1x128xi32>
      %c128_i32 = arith.constant 128 : i32
      %73 = arith.muli %1, %c128_i32 : i32
      %74 = vector.broadcast %73 : i32 to vector<1x128xi32>
      %75 = arith.addi %74, %72 : vector<1x128xi32>
      %c100_i32 = arith.constant 100 : i32
      %76 = vector.broadcast %c100_i32 : i32 to vector<1x128xi32>
      %77 = arith.cmpi slt, %75, %76 : vector<1x128xi32>
      %c0_27 = arith.constant 0 : index
      %c0_28 = arith.constant 0 : index
      %78 = vector.load %arg5[%c0_27, %c0_28] : memref<1x128xf32, #tpu.memory_space<vmem>>, vector<1x128xf32>
      %cst_29 = arith.constant 0.000000e+00 : f32
      %79 = vector.broadcast %cst_29 : f32 to vector<1x128xf32>
      %80 = arith.select %77, %62, %79 : vector<1x128xi1>, vector<1x128xf32>
      %81 = arith.addf %78, %80 : vector<1x128xf32>
      %c0_30 = arith.constant 0 : index
      %c0_31 = arith.constant 0 : index
      %82 = vector.load %arg5[%c0_30, %c0_31] : memref<1x128xf32, #tpu.memory_space<vmem>>, vector<1x128xf32>
      tpu.vector_store %arg5[%c0_30, %c0_31], %81 {strides = array<i32>} : memref<1x128xf32, #tpu.memory_space<vmem>>, vector<1x128xf32>,
    } else {
    }
    %c0_i32_25 = arith.constant 0 : i32
    %69 = arith.cmpi eq, %arg1, %c0_i32_25 : i32
    %70 = arith.extui %69 : i1 to i32
    %c0_i32_26 = arith.constant 0 : i32
    %71 = arith.cmpi ne, %70, %c0_i32_26 : i32
    scf.if %71 {
      %72 = tpu.iota {dimensions = array<i32: 1>} : vector<1x128xi32>
      %c0_i32_27 = arith.constant 0 : i32
      %73 = vector.broadcast %c0_i32_27 : i32 to vector<1x128xi32>
      %74 = arith.cmpi eq, %72, %73 : vector<1x128xi32>
      %c0_28 = arith.constant 0 : index
      %c0_29 = arith.constant 0 : index
      %75 = vector.load %arg5[%c0_28, %c0_29] : memref<1x128xf32, #tpu.memory_space<vmem>>, vector<1x128xf32>
      %76 = vector.shape_cast %75 : vector<1x128xf32> to vector<1x1x128xf32>
      %cst_30 = arith.constant dense<0.000000e+00> : vector<1xf32>
      %77 = vector.multi_reduction <add>, %76, %cst_30 [1, 2] : vector<1x1x128xf32> to vector<1xf32>
      %78 = vector.shape_cast %77 : vector<1xf32> to vector<1x1x1xf32>
      %79 = vector.extract %78[0, 0, 0] : f32 from vector<1x1x1xf32>
      %cst_31 = arith.constant 0.00999999977 : f32
      %80 = arith.mulf %79, %cst_31 : f32
      %cst_32 = arith.constant 0.000000e+00 : f32
      %81 = vector.broadcast %80 : f32 to vector<1x128xf32>
      %82 = vector.broadcast %cst_32 : f32 to vector<1x128xf32>
      %83 = arith.select %74, %81, %82 : vector<1x128xi1>, vector<1x128xf32>
      %c0_33 = arith.constant 0 : index
      %c0_34 = arith.constant 0 : index
      %84 = vector.load %arg4[%c0_33, %c0_34] : memref<1x128xf32, #tpu.memory_space<vmem>>, vector<1x128xf32>
      tpu.vector_store %arg4[%c0_33, %c0_34], %83 {strides = array<i32>} : memref<1x128xf32, #tpu.memory_space<vmem>>, vector<1x128xf32>,
    } else {
    }
    return
  }
  func.func @transform_0(%arg0: i32, %arg1: i32) -> (i32, i32) {
    %c1_i32 = arith.constant 1 : i32
    %0 = arith.muli %arg0, %c1_i32 : i32
    %1 = arith.addi %0, %arg1 : i32
    %c0_i32 = arith.constant 0 : i32
    %2 = arith.minsi %1, %c0_i32 : i32
    %c0_i32_0 = arith.constant 0 : i32
    %c0_i32_1 = arith.constant 0 : i32
    return %c0_i32_0, %2 : i32, i32
  }
  func.func @transform_1(%arg0: i32, %arg1: i32) -> (i32, i32) {
    %c1_i32 = arith.constant 1 : i32
    %0 = arith.muli %arg0, %c1_i32 : i32
    %1 = arith.addi %0, %arg1 : i32
    %c0_i32 = arith.constant 0 : i32
    %2 = arith.minsi %1, %c0_i32 : i32
    %c0_i32_0 = arith.constant 0 : i32
    %c0_i32_1 = arith.constant 0 : i32
    return %c0_i32_0, %2 : i32, i32
  }
  func.func @transform_2(%arg0: i32, %arg1: i32) -> (i32, i32) {
    %c0_i32 = arith.constant 0 : i32
    %c0_i32_0 = arith.constant 0 : i32
    return %c0_i32, %arg0 : i32, i32
  }
}

</mosaic_0001>

<llo_original>
// kernel: tpu_custom_call.1
$region0: #{tpu_custom_call.1}
  #allocation0 [shape = 'u32[]', space=smem, size = 0x4, offset = 0x4, fixed_abs, tag = 'smem constant byte address 0x4 - core index']
  #allocation1 [shape = 'u32[72,128]{1,0:T(1,128)}', space=vmem, size = 0x9000, scoped, tag = 'internal scratch']
  #allocation2 [shape = 'f32[1,128]{1,0:T(1,128)}', space=vmem, size = 0x200, scoped, tag = 'scratch operand']
  %s0 = inlined_call_operand.hbm [shape: f32[10,100], index: 0, kind: input, shape index: {}]
  %s1 = inlined_call_operand.hbm [shape: s32[1,100], index: 1, kind: input, shape index: {}]
  %s2 = inlined_call_operand.hbm [shape: f32[1,256], index: 2, kind: output, shape index: {}]
  %s3 = sld [smem:[#allocation0]]
  $region65: #{tpu_custom_call.1} parent=0
    _
  %s5 = ssub.s32 1, %s3
  %s6 = scalar_select 0, %s5, %s3
  $region1: #{tpu_custom_call.1} parent=0
    #allocation3 [shape = 'u8[16384]{0}', space=vmem, size = 0x4000, scoped, tag = 'input window, operand 0']
    #allocation4 [shape = 's32[2]{0}', space=sflag, size = 0x8, scoped, tag = 'scoped memory for tpu_custom_call.1']
    #allocation5 [shape = 's32[2]{0}', space=sflag, size = 0x8, scoped, tag = 'scoped memory for tpu_custom_call.1']
    #allocation6 [shape = 'u8[1024]{0}', space=vmem, size = 0x400, scoped, tag = 'input window, operand 1']
    #allocation7 [shape = 's32[2]{0}', space=sflag, size = 0x8, scoped, tag = 'scoped memory for tpu_custom_call.1']
    #allocation8 [shape = 'u8[1024]{0}', space=vmem, size = 0x400, scoped, tag = 'output window, operand 0']
    %7 = vsyncpa [#allocation4], 0
    %s8 = scalar_lea.sflag [#allocation4], 1
    %9 = vsyncpa %s8, 0
    %10 = vsyncpa [#allocation7], 0
    %s11 = scalar_lea.sflag [#allocation7], 1
    %12 = vsyncpa %s11, 0
    %13 = vsyncpa [#allocation5], 0
    %s14 = scalar_lea.sflag [#allocation5], 1
    %15 = vsyncpa %s14, 0
    loop: start=0, step=1, limit=4
    $region2: #{tpu_custom_call.1} parent=1 // loop_pre_header
      _
    $region3: #{tpu_custom_call.1} parent=1 // loop_header
      %s17 = sphi 0, %s21
      %p18 = scmp.ge.s32.totalorder %s17, 4
      %s24 = sphi 0, %s36
      %s25 = sphi 0, %s32
      %s26 = sphi 0, %s24
      %s27 = sphi 0, %s25
      %s28 = sphi 0, %s26
      %s29 = sphi 0, %s27
      %s45 = sphi 0, %s47
      %s48 = sphi 0, %s45
      %s49 = sphi 0, %s48
      %s65 = sphi 0, %s49
      %s77 = sphi 0, %s79
      %s80 = sphi 0, %s77
      %s81 = sphi 0, %s80
      %s97 = sphi 0, %s81
      %s103 = sphi 0, %s105
      %s106 = sphi 0, %s103
      %s107 = sphi 0, %s106
      %s123 = sphi 0, %s107
    $region4: #{tpu_custom_call.1} parent=1 // loop_header_branch
      %20 = sbr.rel (%p18) target = $region8
    $region5: #{tpu_custom_call.1} parent=1 // loop_body
      %s22 = ssub.s32 %s17, 1
      %s23 = ssub.s32 %s17, 2
      %s30 = sadd.s32 1, %s25
      %p31 = scmp.ge.s32.totalorder %s30, 1
      %s32 = scalar_select %p31, 0, %s30
      %s33 = sadd.s32 1, %s24
      %s34 = scalar_select %p31, %s33, %s24
      %p35 = scmp.ge.s32.totalorder %s34, 2
      %s36 = scalar_select %p35, 0, %s34
      %s37 = sadd.s32 %s24, %s25
      %p38 = scmp.lt.s32.totalorder %s37, 0
      %s39 = scalar_select %p38, %s37, 0
      %s40 = sadd.s32 %s36, %s32
      %p41 = scmp.lt.s32.totalorder %s40, 0
      %s42 = scalar_select %p41, %s40, 0
      %s43 = ssub.s32 %s39, %s42
      %p44 = scmp.eq.s32.totalorder %s43, 0
      %s46 = sadd.s32 %s45, 1
      %s47 = scalar_select %p44, %s45, %s46
      %p50 = pneg %p44
      %p51 = scmp.eq.s32.totalorder %s17, 1
      %p52 = por %p50, %p51
      %p53 = scmp.ne.s32.totalorder %s45, %s48
      %p54 = scmp.eq.s32.totalorder %s17, 0
      %p55 = por %p53, %p54
      %p56 = scmp.ne.s32.totalorder %s45, %s48
      %p57 = scmp.eq.s32.totalorder %s22, 1
      %p58 = por %p56, %p57
      %p59 = scmp.ne.s32.totalorder %s48, %s49
      %p60 = scmp.eq.s32.totalorder %s22, 0
      %p61 = por %p59, %p60
      %p62 = scmp.ne.s32.totalorder %s48, %s49
      %p63 = scmp.eq.s32.totalorder %s23, 1
      %p64 = por %p62, %p63
      %p66 = scmp.ne.s32.totalorder %s49, %s65
      %p67 = scmp.eq.s32.totalorder %s23, 0
      %p68 = por %p66, %p67
      %s69 = sadd.s32 %s24, %s25
      %p70 = scmp.lt.s32.totalorder %s69, 0
      %s71 = scalar_select %p70, %s69, 0
      %s72 = sadd.s32 %s36, %s32
      %p73 = scmp.lt.s32.totalorder %s72, 0
      %s74 = scalar_select %p73, %s72, 0
      %s75 = ssub.s32 %s71, %s74
      %p76 = scmp.eq.s32.totalorder %s75, 0
      %s78 = sadd.s32 %s77, 1
      %s79 = scalar_select %p76, %s77, %s78
      %p82 = pneg %p76
      %p83 = scmp.eq.s32.totalorder %s17, 1
      %p84 = por %p82, %p83
      %p85 = scmp.ne.s32.totalorder %s77, %s80
      %p86 = scmp.eq.s32.totalorder %s17, 0
      %p87 = por %p85, %p86
      %p88 = scmp.ne.s32.totalorder %s77, %s80
      %p89 = scmp.eq.s32.totalorder %s22, 1
      %p90 = por %p88, %p89
      %p91 = scmp.ne.s32.totalorder %s80, %s81
      %p92 = scmp.eq.s32.totalorder %s22, 0
      %p93 = por %p91, %p92
      %p94 = scmp.ne.s32.totalorder %s80, %s81
      %p95 = scmp.eq.s32.totalorder %s23, 1
      %p96 = por %p94, %p95
      %p98 = scmp.ne.s32.totalorder %s81, %s97
      %p99 = scmp.eq.s32.totalorder %s23, 0
      %p100 = por %p98, %p99
      %s101 = ssub.s32 %s24, %s36
      %p102 = scmp.eq.s32.totalorder %s101, 0
      %s104 = sadd.s32 %s103, 1
      %s105 = scalar_select %p102, %s103, %s104
      %p108 = pneg %p102
      %p109 = scmp.eq.s32.totalorder %s17, 1
      %p110 = por %p108, %p109
      %p111 = scmp.ne.s32.totalorder %s103, %s106
      %p112 = scmp.eq.s32.totalorder %s17, 0
      %p113 = por %p111, %p112
      %p114 = scmp.ne.s32.totalorder %s103, %s106
      %p115 = scmp.eq.s32.totalorder %s22, 1
      %p116 = por %p114, %p115
      %p117 = scmp.ne.s32.totalorder %s106, %s107
      %p118 = scmp.eq.s32.totalorder %s22, 0
      %p119 = por %p117, %p118
      %p120 = scmp.ne.s32.totalorder %s106, %s107
      %p121 = scmp.eq.s32.totalorder %s23, 1
      %p122 = por %p120, %p121
      %p124 = scmp.ne.s32.totalorder %s107, %s123
      %p125 = scmp.eq.s32.totalorder %s23, 0
      %p126 = por %p124, %p125
      %p127 = scmp.le.s32.totalorder 1, %s17
      %p128 = scmp.lt.s32.totalorder %s17, 3
      %p129 = pnand %p127, %p128
      %p130 = pneg %p129
      // Predicated region
      $region9: #{tpu_custom_call.1} parent=5 // pred_check
        _
      $region10: #{tpu_custom_call.1} parent=5 // pred_check_branch
        %132 = sbr.rel (%p129) target = $region12
      $region11: #{tpu_custom_call.1} parent=5 // pred_region
        %s133 = ssub.s32 %s17, 1
      $region12: #{tpu_custom_call.1} parent=5 // pred_fallthru
        _
      %p134 = scmp.lt.s32.totalorder %s17, 2
      // Predicated region
      $region13: #{tpu_custom_call.1} parent=5 // pred_check
        %p135 = pneg %p134
      $region14: #{tpu_custom_call.1} parent=5 // pred_check_branch
        %137 = sbr.rel (%p135) target = $region16
      $region15: #{tpu_custom_call.1} parent=5 // pred_region
        // Predicated region
        $region17: #{tpu_custom_call.1} parent=15 // pred_check
          %p138 = pneg %p55
        $region18: #{tpu_custom_call.1} parent=15 // pred_check_branch
          %140 = sbr.rel (%p138) target = $region20
        $region19: #{tpu_custom_call.1} parent=15 // pred_region
          %s141 = sand.u32 %s45, 1
          %s142 = scalar_lea.sflag [#allocation4], %s141
          %s143 = sand.u32 %s45, 1
          %s144 = smul.addr %s143, 16
          %s145 = scalar_lea.vmem [#allocation3], %s144
          %s146 = sadd.s32 %s24, %s25
          %p147 = scmp.lt.s32.totalorder %s146, 0
          %s148 = scalar_select %p147, %s146, 0
          %150 = vsyncadd %s142, 0
          %s151 = smul.addr %s148, 8
          %s152 = scalar_lea.hbm %s0, %s151
          %s153 = sshll.u32 %s152, 4
          %s154 = int_to_ptr.hbm [resolvable:$true] %s153
          %s155 = sshll.u32 %s145, 4
          %s156 = int_to_ptr.vmem [resolvable:$true] %s155
          %161 = dma.hbm_to_vmem [thread:$0]  %s154, 256, %s156, %s142, 128, 128, 8
        $region20: #{tpu_custom_call.1} parent=15 // pred_fallthru
          _
        // Predicated region
        $region21: #{tpu_custom_call.1} parent=15 // pred_check
          %p162 = pneg %p87
        $region22: #{tpu_custom_call.1} parent=15 // pred_check_branch
          %164 = sbr.rel (%p162) target = $region24
        $region23: #{tpu_custom_call.1} parent=15 // pred_region
          %s165 = sand.u32 %s77, 1
          %s166 = scalar_lea.sflag [#allocation7], %s165
          %s167 = sand.u32 %s77, 1
          %s168 = scalar_lea.vmem [#allocation6], %s167
          %s169 = sadd.s32 %s24, %s25
          %p170 = scmp.lt.s32.totalorder %s169, 0
          %s171 = scalar_select %p170, %s169, 0
          %173 = vsyncadd %s166, 0
          %s174 = scalar_lea.hbm %s1, %s171
          %s176 = sshll.u32 %s174, 4
          %s177 = int_to_ptr.hbm [resolvable:$true] %s176
          %s178 = sshll.u32 %s168, 4
          %s179 = int_to_ptr.vmem [resolvable:$true] %s178
          %181 = dma.hbm_to_vmem [thread:$0]  %s177, 16, %s179, %s166
        $region24: #{tpu_custom_call.1} parent=15 // pred_fallthru
          _
      $region16: #{tpu_custom_call.1} parent=5 // pred_fallthru
        _
      %p182 = scmp.le.s32.totalorder 1, %s17
      %p183 = scmp.lt.s32.totalorder %s17, 3
      %p184 = pnand %p182, %p183
      %p185 = pneg %p184
      // Predicated region
      $region25: #{tpu_custom_call.1} parent=5 // pred_check
        _
      $region26: #{tpu_custom_call.1} parent=5 // pred_check_branch
        %187 = sbr.rel (%p184) target = $region28
      $region27: #{tpu_custom_call.1} parent=5 // pred_region
        %s188 = ssub.s32 %s17, 1
        %s189 = sand.u32 %s48, 1
        %s190 = scalar_lea.sflag [#allocation4], %s189
        %s191 = sand.u32 %s48, 1
        %s192 = smul.addr %s191, 16
        %s193 = scalar_lea.vmem [#allocation3], %s192
        // Predicated region
        $region29: #{tpu_custom_call.1} parent=27 // pred_check
          %p194 = pneg %p61
        $region30: #{tpu_custom_call.1} parent=27 // pred_check_branch
          %196 = sbr.rel (%p194) target = $region32
        $region31: #{tpu_custom_call.1} parent=27 // pred_region
          %198 = dma.done %s190, 256
        $region32: #{tpu_custom_call.1} parent=27 // pred_fallthru
          _
        %s199 = sand.u32 %s80, 1
        %s200 = scalar_lea.sflag [#allocation7], %s199
        %s201 = sand.u32 %s80, 1
        %s202 = scalar_lea.vmem [#allocation6], %s201
        // Predicated region
        $region33: #{tpu_custom_call.1} parent=27 // pred_check
          %p203 = pneg %p93
        $region34: #{tpu_custom_call.1} parent=27 // pred_check_branch
          %205 = sbr.rel (%p203) target = $region36
        $region35: #{tpu_custom_call.1} parent=27 // pred_region
          %207 = dma.done %s200, 16
        $region36: #{tpu_custom_call.1} parent=27 // pred_fallthru
          _
        %s208 = sand.u32 %s48, 1
        %s209 = scalar_lea.sflag [#allocation4], %s208
        %s210 = sand.u32 %s48, 1
        %s211 = smul.addr %s210, 16
        %s212 = scalar_lea.vmem [#allocation3], %s211
        %p213 = pneg %p61
        %p214 = pneg %p58
        %s215 = sand.u32 %s80, 1
        %s216 = scalar_lea.sflag [#allocation7], %s215
        %s217 = sand.u32 %s80, 1
        %s218 = scalar_lea.vmem [#allocation6], %s217
        %p219 = pneg %p93
        %p220 = pneg %p90
        %p221 = pneg %p119
        %p222 = pneg %p116
        %s223 = sand.u32 %s106, 1
        %s224 = scalar_lea.sflag [#allocation5], %s223
        %s225 = sand.u32 %s106, 1
        %s226 = scalar_lea.vmem [#allocation8], %s225
        %s227 = sadd.s32 %s26, %s27
        %p228 = scmp.lt.s32.totalorder %s227, 0
        %s229 = scalar_select %p228, %s227, 0
        %s230 = sadd.s32 %s26, %s27
        %p231 = scmp.lt.s32.totalorder %s230, 0
        %s232 = scalar_select %p231, %s230, 0
        %s233 = sadd.s32 %s26, %s27
        %p234 = scmp.eq.s32.totalorder %s27, 0
        // Predicated region
        $region37: #{tpu_custom_call.1} parent=27 // pred_check
          %p235 = pneg %p234
        $region38: #{tpu_custom_call.1} parent=27 // pred_check_branch
          %237 = sbr.rel (%p235) target = $region40
        $region39: #{tpu_custom_call.1} parent=27 // pred_region
          %238 = vst [vmem:[#allocation2] sm:$0x1] 0.0
        $region40: #{tpu_custom_call.1} parent=27 // pred_fallthru
          _
        %v239 = vld [vmem:[%s193] sm:$0xff]
        %v240 = vld [vmem:[%s193 + $0x8] sm:$0x3]
        %v241 = vld [vmem:[%s202] sm:$0x1]
        %vm242 = vcmask 1041408
        %v243 = vsel %vm242, %v240, -inf
        %v244 = vmax.f32 %v239, %v243
        %v245 = vrot.slane %v244, 4
        %v246 = vmax.f32 %v244, %v245
        %v247 = vrot.slane %v246, 2
        %v248 = vmax.f32 %v246, %v247
        %v249 = vrot.slane %v248, 1
        %v250 = vmax.f32 %v248, %v249
        %v251 = vsub.f32 %v239, %v250
        %v252 = vsub.f32 %v240, %v250
        %v253 = vmul.f32 %v251, 1.442695
        %v254 = vpow.pop %v253
        %v255 = vmul.f32 %v252, 1.442695
        %v256 = vpow.pop %v255
        %v257 = vsel %vm242, %v256, 0.0
        %v258 = vadd.f32 %v254, %v257
        %v259 = vrot.slane %v258, 4
        %v260 = vadd.f32 %v258, %v259
        %v261 = vrot.slane %v260, 2
        %v262 = vadd.f32 %v260, %v261
        %v263 = vrot.slane %v262, 1
        %v264 = vadd.f32 %v262, %v263
        %v265 = vlog2.pop %v264
        %v266 = vmul.f32 %v265, 0.6931472
        %v267 = vsub.f32 %v251, %v266
        %v268 = vsub.f32 %v252, %v266
        %v269 = vrcp.pop %v264
        %v270 = vmul.f32 %v264, %v269
        %v271 = vsub.f32 1.0, %v270
        %v272 = vmul.f32 %v269, %v271
        %v273 = vadd.f32 %v269, %v272
        %vm274 = vweird.f32 %v264
        %vm275 = vweird.f32 %v269
        %vm276 = vmor %vm274, %vm275
        %v277 = vsel %vm276, %v269, %v273
        %v278 = vand.u32 2147483647, %v264
        %vm279 = vcmp.eq.f32.partialorder %v278, 8.507059e+37
        %v280 = vand.u32 %v264, 2147483648
        %v281 = vor.u32 1.1754944e-38, %v280
        %v282 = vsel %vm279, %v281, %v277
        %v283 = vmul.f32 %v254, %v282
        %v284 = vmul.f32 %v256, %v282
        %v285 = vlaneseq
        %v286 = vshrl.u32 %v285, 7
        %v287 = vadd.s32 %v286, 8
        %v288 = vperm.slane %v241, 0
        %vm289 = vcmp.eq.s32.totalorder %v286, %v288
        %vm290 = vcmp.eq.s32.totalorder %v287, %v288
        %v291 = vsel %vm289, %v267, 0.0
        %v292 = vsel %vm290, %v268, 0.0
        %v293 = vsel %vm242, %v292, 0.0
        %v294 = vadd.f32 %v291, %v293
        %v295 = vrot.slane %v294, 4
        %v296 = vadd.f32 %v294, %v295
        %v297 = vrot.slane %v296, 2
        %v298 = vadd.f32 %v296, %v297
        %v299 = vrot.slane %v298, 1
        %v300 = vadd.f32 %v298, %v299
        %v301 = vmul.f32 %v300, 1.442695
        %v302 = vpow.pop %v301
        %v303 = vsub.f32 1.0, %v283
        %v304 = vsub.f32 1.0, %v284
        %v305 = vmax.f32 %v303, 0.0
        %v306 = vmax.f32 %v304, 0.0
        %v307 = vrsqrt.pop %v305
        %v308 = vmul.f32 %v307, %v305
        %v309 = vmul.f32 %v308, %v307
        %v310 = vmul.f32 0.5, %v309
        %v311 = vsub.f32 1.5, %v310
        %v312 = vmul.f32 %v307, %v311
        %v313 = vmul.f32 %v305, %v312
        %vm314 = vcmp.eq.f32.partialorder %v305, inf
        %v315 = vsel %vm314, %v305, %v313
        %vm316 = vcmp.eq.f32.partialorder %v305, 0.0
        %v317 = vand.u32 %v305, 2147483648
        %v318 = vsel %vm316, %v317, %v315
        %v319 = vrsqrt.pop %v306
        %v320 = vmul.f32 %v319, %v306
        %v321 = vmul.f32 %v320, %v319
        %v322 = vmul.f32 0.5, %v321
        %v323 = vsub.f32 1.5, %v322
        %v324 = vmul.f32 %v319, %v323
        %v325 = vmul.f32 %v306, %v324
        %vm326 = vcmp.eq.f32.partialorder %v306, inf
        %v327 = vsel %vm326, %v306, %v325
        %vm328 = vcmp.eq.f32.partialorder %v306, 0.0
        %v329 = vand.u32 %v306, 2147483648
        %v330 = vsel %vm328, %v329, %v327
        %v331 = vsub.f32 0.0, %v318
        %v332 = vsub.f32 0.0, %v330
        %v333 = vmul.f32 %v331, %v267
        %v334 = vmul.f32 %v332, %v268
        %v335 = vsel %vm242, %v334, 0.0
        %v336 = vadd.f32 %v333, %v335
        %v337 = vrot.slane %v336, 4
        %v338 = vadd.f32 %v336, %v337
        %v339 = vrot.slane %v338, 2
        %v340 = vadd.f32 %v338, %v339
        %v341 = vrot.slane %v340, 1
        %v342 = vadd.f32 %v340, %v341
        %v343 = vsub.f32 1.0, %v302
        %v344 = vmax.f32 %v343, 0.0
        %v345 = vrsqrt.pop %v344
        %v346 = vmul.f32 %v345, %v344
        %v347 = vmul.f32 %v346, %v345
        %v348 = vmul.f32 0.5, %v347
        %v349 = vsub.f32 1.5, %v348
        %v350 = vmul.f32 %v345, %v349
        %v351 = vmul.f32 %v344, %v350
        %vm352 = vcmp.eq.f32.partialorder %v344, inf
        %v353 = vsel %vm352, %v344, %v351
        %vm354 = vcmp.eq.f32.partialorder %v344, 0.0
        %v355 = vand.u32 %v344, 2147483648
        %v356 = vsel %vm354, %v355, %v353
        %v357 = vsub.f32 0.0, %v356
        %v358 = vmul.f32 %v357, %v300
        %v359 = vrcp.pop %v342
        %v360 = vmul.f32 %v342, %v359
        %v361 = vsub.f32 1.0, %v360
        %v362 = vmul.f32 %v359, %v361
        %v363 = vadd.f32 %v359, %v362
        %vm364 = vweird.f32 %v342
        %vm365 = vweird.f32 %v359
        %vm366 = vmor %vm364, %vm365
        %v367 = vsel %vm366, %v359, %v363
        %v368 = vand.u32 2147483647, %v342
        %vm369 = vcmp.eq.f32.partialorder %v368, 8.507059e+37
        %v370 = vand.u32 %v342, 2147483648
        %v371 = vor.u32 1.1754944e-38, %v370
        %v372 = vsel %vm369, %v371, %v367
        %v373 = vmul.f32 %v358, %v372
        %v374 = vmax.f32 %v283, 1e-07
        %v375 = vmax.f32 %v284, 1e-07
        %v376 = vsel %vm242, %v375, 0.0
        %v377 = vadd.f32 %v374, %v376
        %v378 = vrot.slane %v377, 4
        %v379 = vadd.f32 %v377, %v378
        %v380 = vrot.slane %v379, 2
        %v381 = vadd.f32 %v379, %v380
        %v382 = vrot.slane %v381, 1
        %v383 = vadd.f32 %v381, %v382
        %v384 = vmax.f32 %v302, 1e-07
        %v385 = vmin.f32 %v384, 1.0
        %v386 = vsub.f32 %v383, %v385
        %v387 = vmul.f32 %v386, 9.2103405
        %v388 = vadd.f32 %v373, %v387
        %p389 = scmp.lt.s32.totalorder %s233, 0
        // Predicated region
        $region41: #{tpu_custom_call.1} parent=27 // pred_check
          %p390 = pneg %p389
        $region42: #{tpu_custom_call.1} parent=27 // pred_check_branch
          %392 = sbr.rel (%p390) target = $region44
        $region43: #{tpu_custom_call.1} parent=27 // pred_region
          %v393 = vld [vmem:[#allocation2] sm:$0x1]
          %v394 = vadd.f32 %v393, %v388
          %395 = vst [vmem:[#allocation2] sm:$0x1] %v394
        $region44: #{tpu_custom_call.1} parent=27 // pred_fallthru
          _
        %p396 = scmp.ge.s32.totalorder %s233, 0
        // Predicated region
        $region45: #{tpu_custom_call.1} parent=27 // pred_check
          %p397 = pneg %p396
        $region46: #{tpu_custom_call.1} parent=27 // pred_check_branch
          %399 = sbr.rel (%p397) target = $region48
        $region47: #{tpu_custom_call.1} parent=27 // pred_region
          %v400 = vlaneseq
          %v401 = vand.u32 %v400, 127
          %s402 = smul.u32 %s233, 128
          %v403 = vstv %s402
          %v404 = vadd.s32 %v403, %v401
          %vm405 = vcmp.lt.s32.totalorder %v404, 100
          %v406 = vld [vmem:[#allocation2] sm:$0x1]
          %v407 = vsel %vm405, %v388, 0.0
          %v408 = vadd.f32 %v406, %v407
          %409 = vst [vmem:[#allocation2] sm:$0x1] %v408
        $region48: #{tpu_custom_call.1} parent=27 // pred_fallthru
          _
        // Predicated region
        $region49: #{tpu_custom_call.1} parent=27 // pred_check
          %p410 = pneg %p234
        $region50: #{tpu_custom_call.1} parent=27 // pred_check_branch
          %412 = sbr.rel (%p410) target = $region52
        $region51: #{tpu_custom_call.1} parent=27 // pred_region
          %v413 = vlaneseq
          %v414 = vand.u32 %v413, 127
          %vm415 = vcmp.eq.s32.totalorder %v414, 0
          %v416 = vld [vmem:[#allocation2] sm:$0x1]
          %vm417 = vcmask 1040384
          %v418 = vsel %vm417, %v416, 0.0
          %419 = vadd.xlane.f32.xlu0 %v418
          %v420 = vpop.xlane.xlu0 %419
          %v421 = vrot.slane %v420, 4
          %v422 = vadd.f32 %v420, %v421
          %v423 = vrot.slane %v422, 2
          %v424 = vadd.f32 %v422, %v423
          %v425 = vrot.slane %v424, 1
          %v426 = vadd.f32 %v424, %v425
          %s427 = vtos %v426
          %s428 = smul.f32 %s427, 0.01
          %v429 = vstv %s428
          %v430 = vsel %vm415, %v429, 0.0
          %431 = vst [vmem:[%s226] sm:$0x1] %v430
        $region52: #{tpu_custom_call.1} parent=27 // pred_fallthru
          _
        %s432 = sand.u32 %s106, 1
        %s433 = scalar_lea.sflag [#allocation5], %s432
        %s434 = sand.u32 %s106, 1
        %s435 = scalar_lea.vmem [#allocation8], %s434
        // Predicated region
        $region53: #{tpu_custom_call.1} parent=27 // pred_check
          %p436 = pneg %p116
        $region54: #{tpu_custom_call.1} parent=27 // pred_check_branch
          %438 = sbr.rel (%p436) target = $region56
        $region55: #{tpu_custom_call.1} parent=27 // pred_region
          %440 = vsyncadd %s433, 0
          %s441 = scalar_lea.hbm %s2, %s26
          %s443 = sshll.u32 %s435, 4
          %s444 = int_to_ptr.vmem [resolvable:$true] %s443
          %s445 = sshll.u32 %s441, 4
          %s446 = int_to_ptr.hbm [resolvable:$true] %s445
          %448 = dma.vmem_to_hbm [thread:$0]  %s444, 16, %s446, %s433
        $region56: #{tpu_custom_call.1} parent=27 // pred_fallthru
          _
      $region28: #{tpu_custom_call.1} parent=5 // pred_fallthru
        _
      %p449 = scmp.le.s32.totalorder 2, %s17
      // Predicated region
      $region57: #{tpu_custom_call.1} parent=5 // pred_check
        %p450 = pneg %p449
      $region58: #{tpu_custom_call.1} parent=5 // pred_check_branch
        %452 = sbr.rel (%p450) target = $region60
      $region59: #{tpu_custom_call.1} parent=5 // pred_region
        %s453 = ssub.s32 %s17, 2
        // Predicated region
        $region61: #{tpu_custom_call.1} parent=59 // pred_check
          %p454 = pneg %p122
        $region62: #{tpu_custom_call.1} parent=59 // pred_check_branch
          %456 = sbr.rel (%p454) target = $region64
        $region63: #{tpu_custom_call.1} parent=59 // pred_region
          %s457 = sand.u32 %s107, 1
          %s458 = scalar_lea.sflag [#allocation5], %s457
          %s459 = sand.u32 %s107, 1
          %s460 = scalar_lea.vmem [#allocation8], %s459
          %462 = dma.done %s458, 16
        $region64: #{tpu_custom_call.1} parent=59 // pred_fallthru
          _
      $region60: #{tpu_custom_call.1} parent=5 // pred_fallthru
        _
    $region6: #{tpu_custom_call.1} parent=1 // loop_footer
      %s21 = sadd.s32 1, %s17
    $region7: #{tpu_custom_call.1} parent=1 // loop_footer_branch
      %16 = sbr.rel target = $region3
    $region8: #{tpu_custom_call.1} parent=1 // loop_exit
      _
    %463 = vsyncpa [#allocation4], 1
    %s464 = scalar_lea.sflag [#allocation4], 1
    %465 = vsyncpa %s464, 1
    %466 = vsyncpa [#allocation7], 1
    %s467 = scalar_lea.sflag [#allocation7], 1
    %468 = vsyncpa %s467, 1
    %469 = vsyncpa [#allocation5], 1
    %s470 = scalar_lea.sflag [#allocation5], 1
    %471 = vsyncpa %s470, 1

</llo_original>
